<compile_context>
chip_gen: v5e
topology: v5e:2x2
jax: 0.10.0
libtpu: 0.0.40
codegen_flags: <defaults>
</compile_context>

<pallas_src>
from functools import partial

import jax
import jax.numpy as jnp
import numpy as np
from jax.experimental import pallas as pl
from jax.experimental.pallas import tpu as pltpu


def matmul_bias_relu_kernel(x_ref, w_ref, b_ref, o_ref, *, precision):
    # x_ref: (tile_mp, KP)     packed im2col rows (compute dtype)
    # w_ref: (KP, LANES)       block-diagonal / padded weight slab
    # b_ref: (1, LANES)        bias, f32
    # o_ref: (tile_mp, LANES)  f32, fully lane-dense (unmasked stores)
    acc = jnp.dot(x_ref[...], w_ref[...],
                  preferred_element_type=jnp.float32, precision=precision)
    o_ref[...] = jnp.maximum(acc + b_ref[...], 0.0).astype(o_ref.dtype)


def _num_output_blocks():
    """One grid block per TensorCore: 2 on v7x, 1 on v5e/v6e (and fallback)."""
    try:
        kind = jax.devices()[0].device_kind.lower()
    except Exception:
        kind = ""
    return 2 if "v7" in kind else 1


@partial(jax.jit, static_argnames=("compute_dtype", "num_blocks"))
def conv2d_relu(x_nchw, w_oihw, bias, *, compute_dtype=jnp.bfloat16,
                num_blocks=1):
    """Forward pass of the PyTorch `Conv2d` module (conv3x3 s1 p1 + ReLU)."""
    N, Cin, H, W = x_nchw.shape
    Cout = w_oihw.shape[0]
    assert Cout <= 128, "single 128-lane output tile assumes Cout <= 128"
    K = 9 * Cin

    # Pack PACK spatial positions x Cout channels per 128-lane output row so
    # no zero lanes are ever written (falls back to Cout->128 zero padding if
    # Cout does not divide 128).
    PACK = 128 // Cout if (128 % Cout == 0 and Cout < 128) else 1
    LANES = PACK * Cout if PACK > 1 else 128
    KP = PACK * K

    # ---- wrapper-side layout plumbing (plain JAX, fused under jit) --------
    # TODO(synk): if the surrounding model runs NHWC, drop both NCHW<->NHWC
    # transposes; at real sizes build patches in-kernel from an HBM ref.
    x_nhwc = jnp.transpose(x_nchw, (0, 2, 3, 1))                  # (N,H,W,Cin)
    x_pad = jnp.pad(x_nhwc, ((0, 0), (1, 1), (1, 1), (0, 0)))     # halo
    taps = [x_pad[:, kh:kh + H, kw:kw + W, :]
            for kh in range(3) for kw in range(3)]                # 9x (N,H,W,Cin)
    M = N * H * W
    patches = jnp.stack(taps, axis=3).reshape(M, K)               # (M, 9*Cin)

    # Pad M so packed rows split evenly into num_blocks sublane-aligned tiles,
    # then fold PACK consecutive rows into one (contiguous row-major reshape).
    m_granule = PACK * 8 * num_blocks
    M_pad = pl.cdiv(M, m_granule) * m_granule
    if M_pad != M:
        patches = jnp.pad(patches, ((0, M_pad - M), (0, 0)))
    MP = M_pad // PACK
    tile_mp = MP // num_blocks
    patches = patches.reshape(MP, KP).astype(compute_dtype)       # (MP, KP)

    # Weight slab: OIHW -> (kh,kw,Cin,Cout) -> (K, Cout); K ordering matches
    # the patches.  Packed path: block-diagonal kron(I_PACK, W) so output lane
    # s*Cout+c of packed row r is spatial position r*PACK+s, channel c.
    w_flat = jnp.transpose(w_oihw, (2, 3, 1, 0)).reshape(K, Cout)
    if PACK > 1:
        w_slab = jnp.kron(jnp.eye(PACK, dtype=w_flat.dtype), w_flat)
        b_slab = jnp.tile(bias.astype(jnp.float32), PACK).reshape(1, LANES)
    else:
        w_slab = jnp.pad(w_flat, ((0, 0), (0, LANES - Cout)))
        b_slab = jnp.pad(bias.astype(jnp.float32),
                         (0, LANES - Cout)).reshape(1, LANES)
    w_slab = w_slab.astype(compute_dtype)

    # Exact f32 module parity needs HIGHEST (default decomposes f32 to bf16
    # MXU passes); bf16 path uses the native default.
    precision = (jax.lax.Precision.HIGHEST if compute_dtype == jnp.float32
                 else jax.lax.Precision.DEFAULT)

    out_flat = pl.pallas_call(
        partial(matmul_bias_relu_kernel, precision=precision),
        out_shape=jax.ShapeDtypeStruct((MP, LANES), jnp.float32),
        grid_spec=pltpu.PrefetchScalarGridSpec(
            num_scalar_prefetch=0,
            grid=(num_blocks,),                      # 1 (v5e/v6e) or 2 (v7x)
            in_specs=[
                pl.BlockSpec((tile_mp, KP), lambda i: (i, 0)),
                # Constant index_map: weight/bias are fetched once and stay
                # resident; with grid <= 2 extra pipelining depth on them
                # buys nothing, so no multi-buffering is requested.
                pl.BlockSpec((KP, LANES), lambda i: (0, 0)),
                pl.BlockSpec((1, LANES), lambda i: (0, 0)),
            ],
            out_specs=pl.BlockSpec((tile_mp, LANES), lambda i: (i, 0)),
        ),
        compiler_params=pltpu.CompilerParams(
            dimension_semantics=("parallel",)),
        # VMEM footprint here is <1 MiB, so the default scoped limit is fine;
        # re-derive for v7x (64 MiB physical) at real VGG layer sizes.
    )(patches, w_slab, b_slab)

    # Un-pack lanes -> (spatial, channel), drop padded rows, restore NCHW.
    out = out_flat.reshape(MP * PACK, LANES // PACK)[:M, :Cout]
    out = out.reshape(N, H, W, Cout)
    return jnp.transpose(out, (0, 3, 1, 2)).astype(x_nchw.dtype)


if __name__ == "__main__":
    # Module config: Conv2d(size1=4, size2=8) -> Cin=4, Cout=8.
    N, Cin, Cout, H, W = 2, 4, 8, 16, 16

    key = jax.random.PRNGKey(0)
    kx, kw = jax.random.split(key)

    x = jax.random.normal(kx, (N, Cin, H, W), dtype=jnp.float32)

    # Kaiming normal, mode='fan_out', nonlinearity='relu'; bias = 0.
    fan_out = Cout * 3 * 3
    std = float(np.sqrt(2.0 / fan_out))
    w = jax.random.normal(kw, (Cout, Cin, 3, 3), dtype=jnp.float32) * std
    b = jnp.zeros((Cout,), dtype=jnp.float32)

    # Reference (same semantics as the PyTorch conv2d + ReLU), exact f32.
    ref = jax.lax.conv_general_dilated(
        x, w, window_strides=(1, 1), padding=((1, 1), (1, 1)),
        dimension_numbers=("NCHW", "OIHW", "NCHW"),
        precision=jax.lax.Precision.HIGHEST)
    ref = jnp.maximum(ref + b[None, :, None, None], 0.0)

    num_blocks = _num_output_blocks()

    # Default path: bf16 operands (MXU-native on all generations), f32 accum.
    out_bf16 = conv2d_relu(x, w, b, num_blocks=num_blocks)
    out_bf16 = jax.block_until_ready(out_bf16)
    np.testing.assert_allclose(np.asarray(out_bf16), np.asarray(ref),
                               rtol=5e-2, atol=5e-2)

    # f32 + HIGHEST-precision path: exact module parity check.
    out_f32 = conv2d_relu(x, w, b, compute_dtype=jnp.float32,
                          num_blocks=num_blocks)
    out_f32 = jax.block_until_ready(out_f32)
    np.testing.assert_allclose(np.asarray(out_f32), np.asarray(ref),
                               rtol=1e-4, atol=1e-4)

    print("KERNEL_OK")
</pallas_src>

<mosaic_0001>
module attributes {stable_mosaic.version = 11 : i64} {
  func.func @matmul_bias_relu_kernel(%arg0: i32, %arg1: memref<32x576xbf16, #tpu.memory_space<vmem>>, %arg2: memref<576x128xbf16, #tpu.memory_space<vmem>>, %arg3: memref<1x128xf32, #tpu.memory_space<vmem>>, %arg4: memref<32x128xf32, #tpu.memory_space<vmem>>) attributes {dimension_semantics = [#tpu.dimension_semantics<parallel>], iteration_bounds = array<i64: 1>, scalar_prefetch = 0 : i64, scratch_operands = 0 : i64, tpu.core_type = #tpu.core_type<tc>, window_params = [{transform_indices = @transform_0, window_bounds = array<i64: 32, 576>}, {pipeline_mode = #tpu.pipeline_mode<synchronous>, transform_indices = @transform_1, window_bounds = array<i64: 576, 128>}, {pipeline_mode = #tpu.pipeline_mode<synchronous>, transform_indices = @transform_2, window_bounds = array<i64: 1, 128>}, {transform_indices = @transform_3, window_bounds = array<i64: 32, 128>}]} {
    %c0 = arith.constant 0 : index
    %c0_0 = arith.constant 0 : index
    %0 = vector.load %arg1[%c0, %c0_0] : memref<32x576xbf16, #tpu.memory_space<vmem>>, vector<32x576xbf16>
    %c0_1 = arith.constant 0 : index
    %c0_2 = arith.constant 0 : index
    %1 = vector.load %arg2[%c0_1, %c0_2] : memref<576x128xbf16, #tpu.memory_space<vmem>>, vector<576x128xbf16>
    %cst = arith.constant dense<0.000000e+00> : vector<32x128xf32>
    %2 = tpu.matmul %0, %1, %cst {dimension_numbers = #tpu.dot_dimension_numbers<[1], [0], [0], [1], [0, 0, 1, 1], [], []>} : vector<32x576xbf16>, vector<576x128xbf16>, vector<32x128xf32> -> vector<32x128xf32>
    %c0_3 = arith.constant 0 : index
    %c0_4 = arith.constant 0 : index
    %3 = vector.load %arg3[%c0_3, %c0_4] : memref<1x128xf32, #tpu.memory_space<vmem>>, vector<1x128xf32>
    %4 = vector.broadcast %3 : vector<1x128xf32> to vector<32x128xf32>
    %5 = arith.addf %2, %4 : vector<32x128xf32>
    %cst_5 = arith.constant 0.000000e+00 : f32
    %6 = vector.broadcast %cst_5 : f32 to vector<32x128xf32>
    %7 = arith.maximumf %5, %6 : vector<32x128xf32>
    %c0_6 = arith.constant 0 : index
    %c0_7 = arith.constant 0 : index
    %8 = vector.load %arg4[%c0_6, %c0_7] : memref<32x128xf32, #tpu.memory_space<vmem>>, vector<32x128xf32>
    tpu.vector_store %arg4[%c0_6, %c0_7], %7 {strides = array<i32>} : memref<32x128xf32, #tpu.memory_space<vmem>>, vector<32x128xf32>,
    return
  }
  func.func @transform_0(%arg0: i32) -> (i32, i32) {
    %c0_i32 = arith.constant 0 : i32
    %c0_i32_0 = arith.constant 0 : i32
    return %arg0, %c0_i32 : i32, i32
  }
  func.func @transform_1(%arg0: i32) -> (i32, i32) {
    %c0_i32 = arith.constant 0 : i32
    %c0_i32_0 = arith.constant 0 : i32
    %c0_i32_1 = arith.constant 0 : i32
    return %c0_i32, %c0_i32_0 : i32, i32
  }
  func.func @transform_2(%arg0: i32) -> (i32, i32) {
    %c0_i32 = arith.constant 0 : i32
    %c0_i32_0 = arith.constant 0 : i32
    %c0_i32_1 = arith.constant 0 : i32
    return %c0_i32, %c0_i32_0 : i32, i32
  }
  func.func @transform_3(%arg0: i32) -> (i32, i32) {
    %c0_i32 = arith.constant 0 : i32
    %c0_i32_0 = arith.constant 0 : i32
    return %arg0, %c0_i32 : i32, i32
  }
}

</mosaic_0001>

<llo_original>
// kernel: mul.4
$region0: #{mul.4}
  %s0 = inlined_call_operand.vmem [shape: f32[3,3,4,8], index: 0, kind: input, shape index: {}]
  %s1 = inlined_call_operand.vmem [shape: f32[36,8], index: 1, kind: output, shape index: {}]
  $region1: #{mul.4} parent=0
    #allocation0 [shape = 'u8[36864]{0}', space=vmem, size = 0x9000, scoped, tag = 'scoped mem for input reshape']
    %s3 = ssub.s32 16, 1
    %s4 = scalar_lea.vmem %s0, 32
    %v5 = vld [vmem:[%s4] sm:%s3]
    %s6 = scalar_lea.vmem [#allocation0], 64
    %7 = vst [vmem:[%s6] sm:%s3] %v5
    %s8 = scalar_lea.vmem %s0, 28
    %v9 = vld [vmem:[%s8] sm:%s3]
    %s10 = scalar_lea.vmem [#allocation0], 56
    %11 = vst [vmem:[%s10] sm:%s3] %v9
    %s12 = scalar_lea.vmem %s0, 24
    %v13 = vld [vmem:[%s12] sm:%s3]
    %s14 = scalar_lea.vmem [#allocation0], 48
    %15 = vst [vmem:[%s14] sm:%s3] %v13
    %s16 = scalar_lea.vmem %s0, 20
    %v17 = vld [vmem:[%s16] sm:%s3]
    %s18 = scalar_lea.vmem [#allocation0], 40
    %19 = vst [vmem:[%s18] sm:%s3] %v17
    %s20 = scalar_lea.vmem %s0, 16
    %v21 = vld [vmem:[%s20] sm:%s3]
    %s22 = scalar_lea.vmem [#allocation0], 32
    %23 = vst [vmem:[%s22] sm:%s3] %v21
    %s24 = scalar_lea.vmem %s0, 12
    %v25 = vld [vmem:[%s24] sm:%s3]
    %s26 = scalar_lea.vmem [#allocation0], 24
    %27 = vst [vmem:[%s26] sm:%s3] %v25
    %s28 = scalar_lea.vmem %s0, 8
    %v29 = vld [vmem:[%s28] sm:%s3]
    %s30 = scalar_lea.vmem [#allocation0], 16
    %31 = vst [vmem:[%s30] sm:%s3] %v29
    %s32 = scalar_lea.vmem %s0, 4
    %v33 = vld [vmem:[%s32] sm:%s3]
    %s34 = scalar_lea.vmem [#allocation0], 8
    %35 = vst [vmem:[%s34] sm:%s3] %v33
    %v36 = vld [vmem:[%s0] sm:%s3]
    %37 = vst [vmem:[#allocation0] sm:%s3] %v36
    %v38 = vld [vmem:[#allocation0] sm:$0xf]
    %vm39 = vcmask 64512
    %40 = vst.msk [vmem:[%s1] sm:$0xf] %vm39, %v38
    %s41 = scalar_lea.vmem [#allocation0], 8
    %v42 = vld [vmem:[%s41] sm:$0xf]
    %vm43 = vcmask 64512
    %s44 = scalar_lea.vmem %s1, 4
    %45 = vst.msk [vmem:[%s44] sm:$0xf] %vm43, %v42
    %s46 = scalar_lea.vmem [#allocation0], 16
    %v47 = vld [vmem:[%s46] sm:$0xf]
    %vm48 = vcmask 64512
    %s49 = scalar_lea.vmem %s1, 8
    %50 = vst.msk [vmem:[%s49] sm:$0xf] %vm48, %v47
    %s51 = scalar_lea.vmem [#allocation0], 24
    %v52 = vld [vmem:[%s51] sm:$0xf]
    %vm53 = vcmask 64512
    %s54 = scalar_lea.vmem %s1, 12
    %55 = vst.msk [vmem:[%s54] sm:$0xf] %vm53, %v52
    %s56 = scalar_lea.vmem [#allocation0], 32
    %v57 = vld [vmem:[%s56] sm:$0xf]
    %vm58 = vcmask 64512
    %s59 = scalar_lea.vmem %s1, 16
    %60 = vst.msk [vmem:[%s59] sm:$0xf] %vm58, %v57
    %s61 = scalar_lea.vmem [#allocation0], 40
    %v62 = vld [vmem:[%s61] sm:$0xf]
    %vm63 = vcmask 64512
    %s64 = scalar_lea.vmem %s1, 20
    %65 = vst.msk [vmem:[%s64] sm:$0xf] %vm63, %v62
    %s66 = scalar_lea.vmem [#allocation0], 48
    %v67 = vld [vmem:[%s66] sm:$0xf]
    %vm68 = vcmask 64512
    %s69 = scalar_lea.vmem %s1, 24
    %70 = vst.msk [vmem:[%s69] sm:$0xf] %vm68, %v67
    %s71 = scalar_lea.vmem [#allocation0], 56
    %v72 = vld [vmem:[%s71] sm:$0xf]
    %vm73 = vcmask 64512
    %s74 = scalar_lea.vmem %s1, 28
    %75 = vst.msk [vmem:[%s74] sm:$0xf] %vm73, %v72
    %s76 = scalar_lea.vmem [#allocation0], 64
    %v77 = vld [vmem:[%s76] sm:$0xf]
    %vm78 = vcmask 64512
    %s79 = scalar_lea.vmem %s1, 32
    %80 = vst.msk [vmem:[%s79] sm:$0xf] %vm78, %v77

// kernel: tile.8
$region0: #{tile.8}
  #allocation0 [shape = 's32[1]{0}', space=sflag, size = 0x4, scoped, tag = 'scoped memory for tile.8']
  %s0 = inlined_call_operand.vmem [shape: f32[8], index: 0, kind: input, shape index: {}]
  %s1 = inlined_call_operand.vmem [shape: f32[16,8], index: 1, kind: output, shape index: {}]
  // Predicated region
  $region2: #{tile.8} parent=0 // pred_check
    _
  $region3: #{tile.8} parent=0 // pred_check_branch
    %3 = sbr.rel (0) target = $region5
  $region4: #{tile.8} parent=0 // pred_region
    _
  $region5: #{tile.8} parent=0 // pred_fallthru
    _
  %v4 = vld [vmem:[%s0] ss:$0 sm:$0xff]
  %5 = vst [vmem:[%s1] sm:$0xff] %v4
  %s6 = scalar_lea.vmem %s1, 8
  %7 = vst [vmem:[%s6] sm:$0xff] %v4

// kernel: tile.9
$region0: #{tile.9}
  %s0 = inlined_call_operand.vmem [shape: f32[16,8], index: 0, kind: input, shape index: {}]
  %s1 = inlined_call_operand.vmem [shape: f32[1,128], index: 1, kind: output, shape index: {}]
  $region1: #{tile.9} parent=0
    #allocation0 [shape = 'u8[4096]{0}', space=vmem, size = 0x1000, scoped, tag = 'scoped mem for output reshape']
    %v2 = vld [vmem:[%s0] sm:$0x1]
    %vm3 = vcmask 64512
    %4 = vst.msk [vmem:[#allocation0] sm:$0x1] %vm3, %v2
    %s5 = scalar_lea.vmem %s0, 15
    %v6 = vld [vmem:[%s5] sm:$0x1]
    %7 = vrot.lane.b32.xlu0 %v6, 120
    %v8 = vpop.permute.xlu0 %7
    %vm9 = vcmask 1048512
    %10 = vst.msk [vmem:[#allocation0] sm:$0x1] %vm9, %v8
    %s11 = scalar_lea.vmem %s0, 14
    %v12 = vld [vmem:[%s11] sm:$0x1]
    %13 = vrot.lane.b32.xlu0 %v12, 112
    %v14 = vpop.permute.xlu0 %13
    %vm15 = vcmask 982912
    %16 = vst.msk [vmem:[#allocation0] sm:$0x1] %vm15, %v14
    %s17 = scalar_lea.vmem %s0, 13
    %v18 = vld [vmem:[%s17] sm:$0x1]
    %19 = vrot.lane.b32.xlu0 %v18, 104
    %v20 = vpop.permute.xlu0 %19
    %vm21 = vcmask 917312
    %22 = vst.msk [vmem:[#allocation0] sm:$0x1] %vm21, %v20
    %s23 = scalar_lea.vmem %s0, 12
    %v24 = vld [vmem:[%s23] sm:$0x1]
    %25 = vrot.lane.b32.xlu0 %v24, 96
    %v26 = vpop.permute.xlu0 %25
    %vm27 = vcmask 851712
    %28 = vst.msk [vmem:[#allocation0] sm:$0x1] %vm27, %v26
    %s29 = scalar_lea.vmem %s0, 11
    %v30 = vld [vmem:[%s29] sm:$0x1]
    %31 = vrot.lane.b32.xlu0 %v30, 88
    %v32 = vpop.permute.xlu0 %31
    %vm33 = vcmask 786112
    %34 = vst.msk [vmem:[#allocation0] sm:$0x1] %vm33, %v32
    %s35 = scalar_lea.vmem %s0, 10
    %v36 = vld [vmem:[%s35] sm:$0x1]
    %37 = vrot.lane.b32.xlu0 %v36, 80
    %v38 = vpop.permute.xlu0 %37
    %vm39 = vcmask 720512
    %40 = vst.msk [vmem:[#allocation0] sm:$0x1] %vm39, %v38
    %s41 = scalar_lea.vmem %s0, 9
    %v42 = vld [vmem:[%s41] sm:$0x1]
    %43 = vrot.lane.b32.xlu0 %v42, 72
    %v44 = vpop.permute.xlu0 %43
    %vm45 = vcmask 654912
    %46 = vst.msk [vmem:[#allocation0] sm:$0x1] %vm45, %v44
    %s47 = scalar_lea.vmem %s0, 8
    %v48 = vld [vmem:[%s47] sm:$0x1]
    %49 = vrot.lane.b32.xlu0 %v48, 64
    %v50 = vpop.permute.xlu0 %49
    %vm51 = vcmask 589312
    %52 = vst.msk [vmem:[#allocation0] sm:$0x1] %vm51, %v50
    %s53 = scalar_lea.vmem %s0, 7
    %v54 = vld [vmem:[%s53] sm:$0x1]
    %55 = vrot.lane.b32.xlu0 %v54, 56
    %v56 = vpop.permute.xlu0 %55
    %vm57 = vcmask 523712
    %58 = vst.msk [vmem:[#allocation0] sm:$0x1] %vm57, %v56
    %s59 = scalar_lea.vmem %s0, 6
    %v60 = vld [vmem:[%s59] sm:$0x1]
    %61 = vrot.lane.b32.xlu0 %v60, 48
    %v62 = vpop.permute.xlu0 %61
    %vm63 = vcmask 458112
    %64 = vst.msk [vmem:[#allocation0] sm:$0x1] %vm63, %v62
    %s65 = scalar_lea.vmem %s0, 5
    %v66 = vld [vmem:[%s65] sm:$0x1]
    %67 = vrot.lane.b32.xlu0 %v66, 40
    %v68 = vpop.permute.xlu0 %67
    %vm69 = vcmask 392512
    %70 = vst.msk [vmem:[#allocation0] sm:$0x1] %vm69, %v68
    %s71 = scalar_lea.vmem %s0, 4
    %v72 = vld [vmem:[%s71] sm:$0x1]
    %73 = vrot.lane.b32.xlu0 %v72, 32
    %v74 = vpop.permute.xlu0 %73
    %vm75 = vcmask 326912
    %76 = vst.msk [vmem:[#allocation0] sm:$0x1] %vm75, %v74
    %s77 = scalar_lea.vmem %s0, 3
    %v78 = vld [vmem:[%s77] sm:$0x1]
    %79 = vrot.lane.b32.xlu0 %v78, 24
    %v80 = vpop.permute.xlu0 %79
    %vm81 = vcmask 261312
    %82 = vst.msk [vmem:[#allocation0] sm:$0x1] %vm81, %v80
    %s83 = scalar_lea.vmem %s0, 2
    %v84 = vld [vmem:[%s83] sm:$0x1]
    %85 = vrot.lane.b32.xlu0 %v84, 16
    %v86 = vpop.permute.xlu0 %85
    %vm87 = vcmask 195712
    %88 = vst.msk [vmem:[#allocation0] sm:$0x1] %vm87, %v86
    %s89 = scalar_lea.vmem %s0, 1
    %v90 = vld [vmem:[%s89] sm:$0x1]
    %91 = vrot.lane.b32.xlu0 %v90, 8
    %v92 = vpop.permute.xlu0 %91
    %vm93 = vcmask 130112
    %94 = vst.msk [vmem:[#allocation0] sm:$0x1] %vm93, %v92
    %s96 = ssub.s32 2, 1
    %v97 = vld [vmem:[#allocation0] sm:%s96]
    %s99 = ssub.s32 2, 1
    %100 = vst [vmem:[%s1] sm:%s99] %v97

// kernel: conv2d_relu.1
$region0: #{conv2d_relu.1}
  #allocation0 [shape = 'u32[]', space=smem, size = 0x4, offset = 0x4, fixed_abs, tag = 'smem constant byte address 0x4 - core index']
  #allocation1 [shape = 'u32[72,128]{1,0:T(1,128)}', space=vmem, size = 0x9000, scoped, tag = 'internal scratch']
  %s0 = inlined_call_operand.vmem [shape: bf16[32,576], index: 0, kind: input, shape index: {}]
  %s1 = inlined_call_operand.vmem [shape: bf16[576,128], index: 1, kind: input, shape index: {}]
  %s2 = inlined_call_operand.vmem [shape: f32[1,128], index: 2, kind: input, shape index: {}]
  %s3 = inlined_call_operand.vmem [shape: f32[32,128], index: 3, kind: output, shape index: {}]
  %s4 = sld [smem:[#allocation0]]
  $region22: #{conv2d_relu.1} parent=0
    _
  %s6 = ssub.s32 1, %s4
  %s7 = scalar_select 0, %s6, %s4
  // Predicated region
  $region2: #{conv2d_relu.1} parent=0 // pred_check
    _
  $region3: #{conv2d_relu.1} parent=0 // pred_check_branch
    %9 = sbr.rel (0) target = $region5
  $region4: #{conv2d_relu.1} parent=0 // pred_region
    _
  $region5: #{conv2d_relu.1} parent=0 // pred_fallthru
    _
  // Predicated region
  $region6: #{conv2d_relu.1} parent=0 // pred_check
    _
  $region7: #{conv2d_relu.1} parent=0 // pred_check_branch
    %11 = sbr.rel (0) target = $region9
  $region8: #{conv2d_relu.1} parent=0 // pred_region
    _
  $region9: #{conv2d_relu.1} parent=0 // pred_fallthru
    _
  // Predicated region
  $region10: #{conv2d_relu.1} parent=0 // pred_check
    _
  $region11: #{conv2d_relu.1} parent=0 // pred_check_branch
    %13 = sbr.rel (0) target = $region13
  $region12: #{conv2d_relu.1} parent=0 // pred_region
    _
  $region13: #{conv2d_relu.1} parent=0 // pred_fallthru
    _
  %v15 = vld [vmem:[%s0] sm:$0xff]
  %v16 = vld [vmem:[%s0 + $0x8] sm:$0xff]
  %v17 = vld [vmem:[%s0 + $0x10] sm:$0xf]
  %v18 = vld [vmem:[%s0 + $0x14] sm:$0xff]
  %v19 = vld [vmem:[%s0 + $0x1c] sm:$0xff]
  %v20 = vld [vmem:[%s0 + $0x24] sm:$0xf]
  %v21 = vld [vmem:[%s0 + $0x28] sm:$0xff]
  %v22 = vld [vmem:[%s0 + $0x30] sm:$0xff]
  %v23 = vld [vmem:[%s0 + $0x38] sm:$0xf]
  %v24 = vld [vmem:[%s0 + $0x3c] sm:$0xff]
  %v25 = vld [vmem:[%s0 + $0x44] sm:$0xff]
  %v26 = vld [vmem:[%s0 + $0x4c] sm:$0xf]
  %v27 = vld [vmem:[%s1] sm:$0xf]
  %v28 = vld [vmem:[%s1 + $0x4] sm:$0xf]
  %v29 = vld [vmem:[%s1 + $0x8] sm:$0xf]
  %v30 = vld [vmem:[%s1 + $0xc] sm:$0xf]
  %v31 = vld [vmem:[%s1 + $0x10] sm:$0xf]
  %v32 = vld [vmem:[%s1 + $0x14] sm:$0xf]
  %v33 = vld [vmem:[%s1 + $0x18] sm:$0xf]
  %v34 = vld [vmem:[%s1 + $0x1c] sm:$0xf]
  %v35 = vld [vmem:[%s1 + $0x20] sm:$0xf]
  %v36 = vld [vmem:[%s1 + $0x24] sm:$0xf]
  %v37 = vld [vmem:[%s1 + $0x28] sm:$0xf]
  %v38 = vld [vmem:[%s1 + $0x2c] sm:$0xf]
  %v39 = vld [vmem:[%s1 + $0x30] sm:$0xf]
  %v40 = vld [vmem:[%s1 + $0x34] sm:$0xf]
  %v41 = vld [vmem:[%s1 + $0x38] sm:$0xf]
  %v42 = vld [vmem:[%s1 + $0x3c] sm:$0xf]
  %v43 = vld [vmem:[%s1 + $0x40] sm:$0xf]
  %v44 = vld [vmem:[%s1 + $0x44] sm:$0xf]
  %v45 = vld [vmem:[%s1 + $0x48] sm:$0xf]
  %v46 = vld [vmem:[%s1 + $0x4c] sm:$0xf]
  %v47 = vld [vmem:[%s1 + $0x50] sm:$0xf]
  %v48 = vld [vmem:[%s1 + $0x54] sm:$0xf]
  %v49 = vld [vmem:[%s1 + $0x58] sm:$0xf]
  %v50 = vld [vmem:[%s1 + $0x5c] sm:$0xf]
  %v51 = vld [vmem:[%s1 + $0x60] sm:$0xf]
  %v52 = vld [vmem:[%s1 + $0x64] sm:$0xf]
  %v53 = vld [vmem:[%s1 + $0x68] sm:$0xf]
  %v54 = vld [vmem:[%s1 + $0x6c] sm:$0xf]
  %v55 = vld [vmem:[%s1 + $0x70] sm:$0xf]
  %v56 = vld [vmem:[%s1 + $0x74] sm:$0xf]
  %v57 = vld [vmem:[%s1 + $0x78] sm:$0xf]
  %v58 = vld [vmem:[%s1 + $0x7c] sm:$0xf]
  %v59 = vld [vmem:[%s1 + $0x80] sm:$0xf]
  %v60 = vld [vmem:[%s1 + $0x84] sm:$0xf]
  %v61 = vld [vmem:[%s1 + $0x88] sm:$0xf]
  %v62 = vld [vmem:[%s1 + $0x8c] sm:$0xf]
  %v63 = vld [vmem:[%s1 + $0x90] sm:$0xf]
  %v64 = vld [vmem:[%s1 + $0x94] sm:$0xf]
  %v65 = vld [vmem:[%s1 + $0x98] sm:$0xf]
  %v66 = vld [vmem:[%s1 + $0x9c] sm:$0xf]
  %v67 = vld [vmem:[%s1 + $0xa0] sm:$0xf]
  %v68 = vld [vmem:[%s1 + $0xa4] sm:$0xf]
  %v69 = vld [vmem:[%s1 + $0xa8] sm:$0xf]
  %v70 = vld [vmem:[%s1 + $0xac] sm:$0xf]
  %v71 = vld [vmem:[%s1 + $0xb0] sm:$0xf]
  %v72 = vld [vmem:[%s1 + $0xb4] sm:$0xf]
  %v73 = vld [vmem:[%s1 + $0xb8] sm:$0xf]
  %v74 = vld [vmem:[%s1 + $0xbc] sm:$0xf]
  %v75 = vld [vmem:[%s1 + $0xc0] sm:$0xf]
  %v76 = vld [vmem:[%s1 + $0xc4] sm:$0xf]
  %v77 = vld [vmem:[%s1 + $0xc8] sm:$0xf]
  %v78 = vld [vmem:[%s1 + $0xcc] sm:$0xf]
  %v79 = vld [vmem:[%s1 + $0xd0] sm:$0xf]
  %v80 = vld [vmem:[%s1 + $0xd4] sm:$0xf]
  %v81 = vld [vmem:[%s1 + $0xd8] sm:$0xf]
  %v82 = vld [vmem:[%s1 + $0xdc] sm:$0xf]
  %v83 = vld [vmem:[%s1 + $0xe0] sm:$0xf]
  %v84 = vld [vmem:[%s1 + $0xe4] sm:$0xf]
  %v85 = vld [vmem:[%s1 + $0xe8] sm:$0xf]
  %v86 = vld [vmem:[%s1 + $0xec] sm:$0xf]
  %v87 = vld [vmem:[%s1 + $0xf0] sm:$0xf]
  %v88 = vld [vmem:[%s1 + $0xf4] sm:$0xf]
  %v89 = vld [vmem:[%s1 + $0xf8] sm:$0xf]
  %v90 = vld [vmem:[%s1 + $0xfc] sm:$0xf]
  %v91 = vld [vmem:[%s1 + $0x100] sm:$0xf]
  %v92 = vld [vmem:[%s1 + $0x104] sm:$0xf]
  %v93 = vld [vmem:[%s1 + $0x108] sm:$0xf]
  %v94 = vld [vmem:[%s1 + $0x10c] sm:$0xf]
  %v95 = vld [vmem:[%s1 + $0x110] sm:$0xf]
  %v96 = vld [vmem:[%s1 + $0x114] sm:$0xf]
  %v97 = vld [vmem:[%s1 + $0x118] sm:$0xf]
  %v98 = vld [vmem:[%s1 + $0x11c] sm:$0xf]
  %v99 = vld [vmem:[%s2] sm:$0x1]
  %v101 = vperm.slane %v99, 0
  %v115 = vunpack.c.l.b16 %v15
  %v116 = vunpack.c.h.b16 %v15
  %v117 = vunpack.c.l.b16 %v16
  %v118 = vunpack.c.h.b16 %v16
  %v119 = vunpack.c.l.b16 %v17
  %v120 = vunpack.c.l.b16 %v18
  %v121 = vunpack.c.h.b16 %v18
  %v122 = vunpack.c.l.b16 %v19
  %v123 = vunpack.c.h.b16 %v19
  %v124 = vunpack.c.l.b16 %v20
  %v125 = vunpack.c.l.b16 %v21
  %v126 = vunpack.c.h.b16 %v21
  %v127 = vunpack.c.l.b16 %v22
  %v128 = vunpack.c.h.b16 %v22
  %v129 = vunpack.c.l.b16 %v23
  %v130 = vunpack.c.l.b16 %v24
  %v131 = vunpack.c.h.b16 %v24
  %v132 = vunpack.c.l.b16 %v25
  %v133 = vunpack.c.h.b16 %v25
  %v134 = vunpack.c.l.b16 %v26
  %v135 = vpack.c.b16 %v120, %v115
  %v136 = vpack.c.b16 %v121, %v116
  %v137 = vpack.c.b16 %v122, %v117
  %v138 = vpack.c.b16 %v123, %v118
  %v139 = vpack.c.b16 %v124, %v119
  %v140 = vpack.c.b16 %v130, %v125
  %v141 = vpack.c.b16 %v131, %v126
  %v142 = vpack.c.b16 %v132, %v127
  %v143 = vpack.c.b16 %v133, %v128
  %v144 = vpack.c.b16 %v134, %v129
  %v225 = vunpack.c.l.b16 %v27
  %v226 = vunpack.c.l.b16 %v28
  %v227 = vunpack.c.l.b16 %v29
  %v228 = vunpack.c.l.b16 %v30
  %v229 = vunpack.c.l.b16 %v31
  %v230 = vunpack.c.l.b16 %v32
  %v231 = vunpack.c.l.b16 %v33
  %v232 = vunpack.c.l.b16 %v34
  %v233 = vunpack.c.l.b16 %v35
  %v234 = vunpack.c.l.b16 %v36
  %v235 = vunpack.c.l.b16 %v37
  %v236 = vunpack.c.l.b16 %v38
  %v237 = vunpack.c.l.b16 %v39
  %v238 = vunpack.c.l.b16 %v40
  %v239 = vunpack.c.l.b16 %v41
  %v240 = vunpack.c.l.b16 %v42
  %v241 = vunpack.c.l.b16 %v43
  %v242 = vunpack.c.l.b16 %v44
  %v243 = vunpack.c.l.b16 %v45
  %v244 = vunpack.c.l.b16 %v46
  %v245 = vunpack.c.l.b16 %v47
  %v246 = vunpack.c.l.b16 %v48
  %v247 = vunpack.c.l.b16 %v49
  %v248 = vunpack.c.l.b16 %v50
  %v249 = vunpack.c.l.b16 %v51
  %v250 = vunpack.c.l.b16 %v52
  %v251 = vunpack.c.l.b16 %v53
  %v252 = vunpack.c.l.b16 %v54
  %v253 = vunpack.c.l.b16 %v55
  %v254 = vunpack.c.l.b16 %v56
  %v255 = vunpack.c.l.b16 %v57
  %v256 = vunpack.c.l.b16 %v58
  %v257 = vunpack.c.l.b16 %v59
  %v258 = vunpack.c.l.b16 %v60
  %v259 = vunpack.c.l.b16 %v61
  %v260 = vunpack.c.l.b16 %v62
  %v261 = vunpack.c.l.b16 %v63
  %v262 = vunpack.c.l.b16 %v64
  %v263 = vunpack.c.l.b16 %v65
  %v264 = vunpack.c.l.b16 %v66
  %v265 = vunpack.c.l.b16 %v67
  %v266 = vunpack.c.l.b16 %v68
  %v267 = vunpack.c.l.b16 %v69
  %v268 = vunpack.c.l.b16 %v70
  %v269 = vunpack.c.l.b16 %v71
  %v270 = vunpack.c.l.b16 %v72
  %v271 = vunpack.c.l.b16 %v73
  %v272 = vunpack.c.l.b16 %v74
  %v273 = vunpack.c.l.b16 %v75
  %v274 = vunpack.c.l.b16 %v76
  %v275 = vunpack.c.l.b16 %v77
  %v276 = vunpack.c.l.b16 %v78
  %v277 = vunpack.c.l.b16 %v79
  %v278 = vunpack.c.l.b16 %v80
  %v279 = vunpack.c.l.b16 %v81
  %v280 = vunpack.c.l.b16 %v82
  %v281 = vunpack.c.l.b16 %v83
  %v282 = vunpack.c.l.b16 %v84
  %v283 = vunpack.c.l.b16 %v85
  %v284 = vunpack.c.l.b16 %v86
  %v285 = vunpack.c.l.b16 %v87
  %v286 = vunpack.c.l.b16 %v88
  %v287 = vunpack.c.l.b16 %v89
  %v288 = vunpack.c.l.b16 %v90
  %v289 = vunpack.c.l.b16 %v91
  %v290 = vunpack.c.l.b16 %v92
  %v291 = vunpack.c.l.b16 %v93
  %v292 = vunpack.c.l.b16 %v94
  %v293 = vunpack.c.l.b16 %v95
  %v294 = vunpack.c.l.b16 %v96
  %v295 = vunpack.c.l.b16 %v97
  %v296 = vunpack.c.l.b16 %v98
  %v297 = vpack.c.b16 %v226, %v225
  %v298 = vpack.c.b16 %v228, %v227
  %v299 = vpack.c.b16 %v230, %v229
  %v300 = vpack.c.b16 %v232, %v231
  %v301 = vpack.c.b16 %v234, %v233
  %v302 = vpack.c.b16 %v236, %v235
  %v303 = vpack.c.b16 %v238, %v237
  %v304 = vpack.c.b16 %v240, %v239
  %v305 = vpack.c.b16 %v242, %v241
  %v306 = vpack.c.b16 %v244, %v243
  %v307 = vpack.c.b16 %v246, %v245
  %v308 = vpack.c.b16 %v248, %v247
  %v309 = vpack.c.b16 %v250, %v249
  %v310 = vpack.c.b16 %v252, %v251
  %v311 = vpack.c.b16 %v254, %v253
  %v312 = vpack.c.b16 %v256, %v255
  %v313 = vpack.c.b16 %v258, %v257
  %v314 = vpack.c.b16 %v260, %v259
  %v315 = vpack.c.b16 %v262, %v261
  %v316 = vpack.c.b16 %v264, %v263
  %v317 = vpack.c.b16 %v266, %v265
  %v318 = vpack.c.b16 %v268, %v267
  %v319 = vpack.c.b16 %v270, %v269
  %v320 = vpack.c.b16 %v272, %v271
  %v321 = vpack.c.b16 %v274, %v273
  %v322 = vpack.c.b16 %v276, %v275
  %v323 = vpack.c.b16 %v278, %v277
  %v324 = vpack.c.b16 %v280, %v279
  %v325 = vpack.c.b16 %v282, %v281
  %v326 = vpack.c.b16 %v284, %v283
  %v327 = vpack.c.b16 %v286, %v285
  %v328 = vpack.c.b16 %v288, %v287
  %v329 = vpack.c.b16 %v290, %v289
  %v330 = vpack.c.b16 %v292, %v291
  %v331 = vpack.c.b16 %v294, %v293
  %v332 = vpack.c.b16 %v296, %v295
  %vm369 = vcmask 523264
  %v371 = vsel %vm369, %v139, 0
  %v374 = vsel %vm369, %v144, 0
  %376 = vmatpush.bf16.msra.mxu0 %v304
  %377 = vmatpush.bf16.msra.mxu0 %v303
  %378 = vmatpush.bf16.msra.mxu0 %v302
  %379 = vmatpush.bf16.msra.mxu0 %v301
  %380 = vmatpush.bf16.msra.mxu0 %v300
  %381 = vmatpush.bf16.msra.mxu0 %v299
  %382 = vmatpush.bf16.msra.mxu0 %v298
  %383 = vmatpush.bf16.msra.mxu0 %v297
  %384 = vmatmul.bf16.gmra.mxu0 %v135
  %v385 = vpop.f32.mrf.mxu0
  %v386 = vadd.f32 %v101, %v385
  %v387 = vpop.f32.mrf.mxu0
  %v388 = vadd.f32 %v101, %v387
  %389 = vmatmul.bf16.gmra.mxu0 %v140
  %v390 = vpop.f32.mrf.mxu0
  %v391 = vadd.f32 %v101, %v390
  %v392 = vpop.f32.mrf.mxu0
  %v393 = vadd.f32 %v101, %v392
  %394 = vdwg.mxu0
  %395 = vmatpush.bf16.msra.mxu0 %v312
  %396 = vmatpush.bf16.msra.mxu0 %v311
  %397 = vmatpush.bf16.msra.mxu0 %v310
  %398 = vmatpush.bf16.msra.mxu0 %v309
  %399 = vmatpush.bf16.msra.mxu0 %v308
  %400 = vmatpush.bf16.msra.mxu0 %v307
  %401 = vmatpush.bf16.msra.mxu0 %v306
  %402 = vmatpush.bf16.msra.mxu0 %v305
  %403 = vmatmul.bf16.gmra.mxu0 %v136
  %v404 = vpop.f32.mrf.mxu0
  %v405 = vadd.f32 %v386, %v404
  %v406 = vpop.f32.mrf.mxu0
  %v407 = vadd.f32 %v388, %v406
  %408 = vmatmul.bf16.gmra.mxu0 %v141
  %v409 = vpop.f32.mrf.mxu0
  %v410 = vadd.f32 %v391, %v409
  %v411 = vpop.f32.mrf.mxu0
  %v412 = vadd.f32 %v393, %v411
  %413 = vdwg.mxu0
  %414 = vmatpush.bf16.msra.mxu0 %v320
  %415 = vmatpush.bf16.msra.mxu0 %v319
  %416 = vmatpush.bf16.msra.mxu0 %v318
  %417 = vmatpush.bf16.msra.mxu0 %v317
  %418 = vmatpush.bf16.msra.mxu0 %v316
  %419 = vmatpush.bf16.msra.mxu0 %v315
  %420 = vmatpush.bf16.msra.mxu0 %v314
  %421 = vmatpush.bf16.msra.mxu0 %v313
  %422 = vmatmul.bf16.gmra.mxu0 %v137
  %v423 = vpop.f32.mrf.mxu0
  %v424 = vadd.f32 %v405, %v423
  %v425 = vpop.f32.mrf.mxu0
  %v426 = vadd.f32 %v407, %v425
  %427 = vmatmul.bf16.gmra.mxu0 %v142
  %v428 = vpop.f32.mrf.mxu0
  %v429 = vadd.f32 %v410, %v428
  %v430 = vpop.f32.mrf.mxu0
  %v431 = vadd.f32 %v412, %v430
  %432 = vdwg.mxu0
  %433 = vmatpush.bf16.msra.mxu0 %v328
  %434 = vmatpush.bf16.msra.mxu0 %v327
  %435 = vmatpush.bf16.msra.mxu0 %v326
  %436 = vmatpush.bf16.msra.mxu0 %v325
  %437 = vmatpush.bf16.msra.mxu0 %v324
  %438 = vmatpush.bf16.msra.mxu0 %v323
  %439 = vmatpush.bf16.msra.mxu0 %v322
  %440 = vmatpush.bf16.msra.mxu0 %v321
  %441 = vmatmul.bf16.gmra.mxu0 %v138
  %v442 = vpop.f32.mrf.mxu0
  %v443 = vadd.f32 %v424, %v442
  %v444 = vpop.f32.mrf.mxu0
  %v445 = vadd.f32 %v426, %v444
  %446 = vmatmul.bf16.gmra.mxu0 %v143
  %v447 = vpop.f32.mrf.mxu0
  %v448 = vadd.f32 %v429, %v447
  %v449 = vpop.f32.mrf.mxu0
  %v450 = vadd.f32 %v431, %v449
  %451 = vdwg.mxu0
  %452 = vmatpush.bf16.msra.mxu0 0
  %453 = vmatpush.bf16.msra.mxu0 0
  %454 = vmatpush.bf16.msra.mxu0 0
  %455 = vmatpush.bf16.msra.mxu0 0
  %456 = vmatpush.bf16.msra.mxu0 %v332
  %457 = vmatpush.bf16.msra.mxu0 %v331
  %458 = vmatpush.bf16.msra.mxu0 %v330
  %459 = vmatpush.bf16.msra.mxu0 %v329
  %460 = vmatmul.bf16.gmra.mxu0 %v371
  %v461 = vpop.f32.mrf.mxu0
  %v462 = vadd.f32 %v443, %v461
  %v463 = vpop.f32.mrf.mxu0
  %v464 = vadd.f32 %v445, %v463
  %465 = vmatmul.bf16.gmra.mxu0 %v374
  %v466 = vpop.f32.mrf.mxu0
  %v467 = vadd.f32 %v448, %v466
  %v468 = vpop.f32.mrf.mxu0
  %v469 = vadd.f32 %v450, %v468
  %470 = vdwg.mxu0
  %v471 = vmax.f32 %v462, 0.0
  %v472 = vmax.f32 %v464, 0.0
  %v473 = vmax.f32 %v467, 0.0
  %v474 = vmax.f32 %v469, 0.0
  %475 = vst [vmem:[%s3] sm:$0xff] %v471
  %476 = vst [vmem:[%s3 + $0x8] sm:$0xff] %v472
  %477 = vst [vmem:[%s3 + $0x10] sm:$0xff] %v473
  %478 = vst [vmem:[%s3 + $0x18] sm:$0xff] %v474
  // Predicated region
  $region14: #{conv2d_relu.1} parent=0 // pred_check
    _
  $region15: #{conv2d_relu.1} parent=0 // pred_check_branch
    %480 = sbr.rel (0) target = $region17
  $region16: #{conv2d_relu.1} parent=0 // pred_region
    _
  $region17: #{conv2d_relu.1} parent=0 // pred_fallthru
    _
  // Predicated region
  $region18: #{conv2d_relu.1} parent=0 // pred_check
    _
  $region19: #{conv2d_relu.1} parent=0 // pred_check_branch
    %482 = sbr.rel (0) target = $region21
  $region20: #{conv2d_relu.1} parent=0 // pred_region
    _
  $region21: #{conv2d_relu.1} parent=0 // pred_fallthru
    _

</llo_original>
